<compile_context>
chip_gen: v7x
topology: tpu7x:2x2x1
jax: 0.10.0
libtpu: 0.0.40
codegen_flags: <defaults>
</compile_context>

<pallas_src>
import math
import functools

import jax
import jax.numpy as jnp
import numpy as np
from jax import lax
from jax.experimental import pallas as pl
from jax.experimental.pallas import tpu as pltpu


def _round_up(x, m):
    return ((x + m - 1) // m) * m


def _pad_axis(x, axis, multiple):
    size = x.shape[axis]
    pad = (-size) % multiple
    if pad == 0:
        return x
    widths = [(0, 0)] * x.ndim
    widths[axis] = (0, pad)
    return jnp.pad(x, widths)


# ----------------------------------------------------------------------------
# Pallas kernel: self-attention pooling + logits + cross-entropy (reduction='none')
# ----------------------------------------------------------------------------
def kbrd_kernel(ent_ref, mask_ref, lnode_ref, node_ref,
                wa_ref, ba_ref, wb_ref, bb_ref,
                logits_ref, user_ref, loss_ref,
                user_b_sc, m_sc, l_sc, tgt_sc,
                *, n_valid, n_padded):
    j = pl.program_id(0)

    # --- step 0: attention-pooled user embedding, target logit, accumulator init ---
    @pl.when(j == 0)
    def _():
        ent = ent_ref[...]                                       # (B, L, H) f32
        B, L, H = ent.shape
        ent2 = ent.reshape(B * L, H)
        # SelfAttention: Linear(H,H) -> tanh -> Linear(H,1)
        h = jnp.tanh(jnp.dot(ent2, wa_ref[...],
                             preferred_element_type=jnp.float32) + ba_ref[...])
        scores = (jnp.dot(h, wb_ref[...],
                          preferred_element_type=jnp.float32) + bb_ref[...])
        scores = scores.reshape(B, L)                            # (B, L)
        neg = jnp.finfo(jnp.float32).min
        scores = jnp.where(mask_ref[...] > 0, scores, neg)       # mask==0 -> -big
        scores = scores - jnp.max(scores, axis=-1, keepdims=True)
        p = jnp.exp(scores)
        p = p / jnp.sum(p, axis=-1, keepdims=True)               # softmax over L
        user = jnp.sum(p[..., None] * ent, axis=1)               # (B, H) f32

        user_ref[...] = user.astype(user_ref.dtype)              # write once
        user_b_sc[...] = user.astype(jnp.bfloat16)               # cast once for MXU

        # target logit: user . node_embeds[label]  (label row pre-gathered in glue)
        tgt_sc[...] = jnp.sum(user * lnode_ref[...].astype(jnp.float32),
                              axis=-1, keepdims=True)

        m_sc[...] = jnp.full_like(m_sc, -jnp.inf)
        l_sc[...] = jnp.zeros_like(l_sc)

    # --- logits block: user_embeds @ node_block.T (no explicit transpose) ---
    node_blk = node_ref[...]                                     # (TN, H) bf16
    logits_blk = lax.dot_general(
        user_b_sc[...], node_blk,
        dimension_numbers=(((1,), (1,)), ((), ())),
        preferred_element_type=jnp.float32)                      # (B, TN) f32
    logits_ref[...] = logits_blk.astype(logits_ref.dtype)

    # --- online logsumexp over node tiles (mask padded node rows, static check) ---
    if n_padded > n_valid:
        tn = logits_blk.shape[1]
        ids = j * tn + lax.broadcasted_iota(jnp.int32, logits_blk.shape, 1)
        lse_blk = jnp.where(ids < n_valid, logits_blk, jnp.finfo(jnp.float32).min)
    else:
        lse_blk = logits_blk

    m_prev = m_sc[...]
    m_new = jnp.maximum(m_prev, jnp.max(lse_blk, axis=-1, keepdims=True))
    l_sc[...] = (l_sc[...] * jnp.exp(m_prev - m_new)
                 + jnp.sum(jnp.exp(lse_blk - m_new), axis=-1, keepdims=True))
    m_sc[...] = m_new

    # --- final step: loss = logsumexp(logits) - logits[label] ---
    @pl.when(j == pl.num_programs(0) - 1)
    def _():
        loss_ref[...] = (m_sc[...] + jnp.log(l_sc[...]) - tgt_sc[...]).astype(loss_ref.dtype)


def kbrd_forward_pallas(entity_embeds, entity_mask, node_embeds,
                        wa, ba, wb, bb, labels, *, tile_n=1024):
    B, L, H = entity_embeds.shape
    N = node_embeds.shape[0]

    # --- lane padding: H -> multiple of 128 ---
    H_pad = _round_up(H, 128)
    if H_pad != H:
        entity_embeds = _pad_axis(entity_embeds, 2, 128)
        node_embeds = _pad_axis(node_embeds, 1, 128)
        wa = _pad_axis(_pad_axis(wa, 0, 128), 1, 128)
        ba = _pad_axis(ba, 1, 128)
        wb = _pad_axis(wb, 0, 128)

    # --- sublane padding: B -> multiple of 8 ---
    B_pad = _round_up(B, 8)
    if B_pad != B:
        entity_embeds = _pad_axis(entity_embeds, 0, 8)
        entity_mask = _pad_axis(entity_mask, 0, 8)
        labels = _pad_axis(labels, 0, 8)

    # --- node tiling: large bandwidth-friendly tiles, multiple of 256 ---
    tile_n = max(256, min(_round_up(tile_n, 256), _round_up(N, 256)))
    N_pad = _round_up(N, tile_n)

    # bf16 node table (halves HBM traffic of the dominant stream)
    node_bf16 = _pad_axis(node_embeds, 0, tile_n).astype(jnp.bfloat16)   # (N_pad, H_pad)
    # target node rows gathered in glue (removes per-step gather machinery in-kernel)
    label_node = node_bf16[labels[:, 0]]                                 # (B_pad, H_pad)

    entity_embeds = entity_embeds.astype(jnp.float32)
    entity_mask = entity_mask.astype(jnp.float32)

    grid = (N_pad // tile_n,)

    # --- VMEM budget (double-buffered inputs/outputs + scratch), with headroom ---
    bytes_in = 2 * (B_pad * L * H_pad * 4 + B_pad * L * 4 + B_pad * H_pad * 2
                    + tile_n * H_pad * 2 + H_pad * H_pad * 4 + 2 * H_pad * 4 + 4)
    bytes_out = 2 * (B_pad * tile_n * 4 + B_pad * H_pad * 4 + B_pad * 4)
    bytes_scratch = B_pad * H_pad * 2 + 3 * B_pad * 4
    vmem_limit = int(min(max(2 * (bytes_in + bytes_out + bytes_scratch), 32 << 20),
                         64 << 20))

    cost = pl.CostEstimate(
        flops=2 * B_pad * H_pad * N_pad + 2 * B_pad * L * H_pad * (H_pad + 1),
        transcendentals=B_pad * (N_pad + 2 * L),
        bytes_accessed=(N_pad * H_pad * 2 + B_pad * N_pad * 4
                        + B_pad * L * H_pad * 4 + 2 * B_pad * H_pad * 4
                        + H_pad * H_pad * 4),
    )

    out_shape = (
        jax.ShapeDtypeStruct((B_pad, N_pad), jnp.float32),   # logits
        jax.ShapeDtypeStruct((B_pad, H_pad), jnp.float32),   # user_embeds
        jax.ShapeDtypeStruct((B_pad, 1), jnp.float32),       # per-sample CE loss
    )

    kernel = functools.partial(kbrd_kernel, n_valid=N, n_padded=N_pad)

    logits, user, loss = pl.pallas_call(
        kernel,
        out_shape=out_shape,
        grid=grid,
        in_specs=[
            pl.BlockSpec((B_pad, L, H_pad), lambda j: (0, 0, 0)),   # entity_embeds
            pl.BlockSpec((B_pad, L), lambda j: (0, 0)),             # entity_mask
            pl.BlockSpec((B_pad, H_pad), lambda j: (0, 0)),         # label node rows (bf16)
            pl.BlockSpec((tile_n, H_pad), lambda j: (j, 0)),        # node_embeds block (bf16)
            pl.BlockSpec((H_pad, H_pad), lambda j: (0, 0)),         # attn linear-1 weight
            pl.BlockSpec((1, H_pad), lambda j: (0, 0)),             # attn linear-1 bias
            pl.BlockSpec((H_pad, 1), lambda j: (0, 0)),             # attn linear-2 weight
            pl.BlockSpec((1, 1), lambda j: (0, 0)),                 # attn linear-2 bias
        ],
        out_specs=[
            pl.BlockSpec((B_pad, tile_n), lambda j: (0, j)),        # logits block
            pl.BlockSpec((B_pad, H_pad), lambda j: (0, 0)),         # user_embeds
            pl.BlockSpec((B_pad, 1), lambda j: (0, 0)),             # loss
        ],
        scratch_shapes=[
            pltpu.VMEM((B_pad, H_pad), jnp.bfloat16),   # user embedding (bf16, MXU input)
            pltpu.VMEM((B_pad, 1), jnp.float32),        # running max (logsumexp)
            pltpu.VMEM((B_pad, 1), jnp.float32),        # running sum (logsumexp)
            pltpu.VMEM((B_pad, 1), jnp.float32),        # target logit
        ],
        compiler_params=pltpu.CompilerParams(
            dimension_semantics=("arbitrary",),
            vmem_limit_bytes=vmem_limit,
        ),
        cost_estimate=cost,
    )(entity_embeds, entity_mask, label_node, node_bf16, wa, ba, wb, bb)

    return logits[:B, :N], user[:B, :H], loss[:B, 0]


# ----------------------------------------------------------------------------
# RGCN encoder (glue, plain JAX): basis-decomposition R-GCN with mean aggregation
# TODO(synk): data-dependent scatter message passing has no clean Pallas
# equivalent; it stays in JAX glue (segment_sum).
# ----------------------------------------------------------------------------
def rgcn_conv(x, edge_index, edge_type, basis, comp, root, bias, num_relations):
    N, H = x.shape
    src, dst = edge_index[0], edge_index[1]
    out = x @ root + bias
    rel_w = jnp.einsum('rb,bij->rij', comp, basis)       # (R, H, H)
    for r in range(num_relations):
        sel = (edge_type == r).astype(x.dtype)           # (E,)
        msg = x[src] * sel[:, None]                      # (E, H)
        agg = jax.ops.segment_sum(msg, dst, num_segments=N)
        cnt = jax.ops.segment_sum(sel, dst, num_segments=N)
        agg = agg / jnp.maximum(cnt, 1.0)[:, None]
        out = out + agg @ rel_w[r]
    return out


# ----------------------------------------------------------------------------
# Pure-JAX reference for numerical check (f32 throughout)
# ----------------------------------------------------------------------------
def reference_forward(entity_embeds, entity_mask, node_embeds, wa, ba, wb, bb, labels):
    h = jnp.tanh(entity_embeds @ wa + ba)                # (B, L, H)
    scores = (h @ wb)[..., 0] + bb[0, 0]                 # (B, L)
    scores = jnp.where(entity_mask > 0, scores, jnp.finfo(jnp.float32).min)
    p = jax.nn.softmax(scores, axis=-1)
    user = jnp.einsum('bl,blh->bh', p, entity_embeds)
    logits = user @ node_embeds.T
    lse = jax.scipy.special.logsumexp(logits, axis=-1)
    tgt = jnp.take_along_axis(logits, labels, axis=-1)[:, 0]
    loss = lse - tgt
    return logits, user, loss


if __name__ == "__main__":
    key = jax.random.PRNGKey(0)

    # ---- small shapes consistent with the module ----
    B, L, H = 2, 8, 128
    num_relations, num_bases = 4, 2
    num_entities = 255                       # +1 special token row -> 256 nodes total
    N_total = num_entities + 1
    E = 64                                   # number of KG edges

    keys = jax.random.split(key, 12)

    # node embeddings (same init as the module)
    stdv = math.sqrt(6.0 / (num_entities + H))
    node_embeds_param = jax.random.uniform(keys[0], (num_entities, H),
                                           minval=-stdv, maxval=stdv,
                                           dtype=jnp.float32)

    # RGCN parameters (basis decomposition)
    basis = 0.02 * jax.random.normal(keys[1], (num_bases, H, H), dtype=jnp.float32)
    comp = 0.02 * jax.random.normal(keys[2], (num_relations, num_bases), dtype=jnp.float32)
    root = 0.02 * jax.random.normal(keys[3], (H, H), dtype=jnp.float32)
    bias = jnp.zeros((H,), dtype=jnp.float32)

    # SelfAttention parameters: Linear(H,H) -> tanh -> Linear(H,1)
    bnd = 1.0 / math.sqrt(H)
    wa = jax.random.uniform(keys[4], (H, H), minval=-bnd, maxval=bnd, dtype=jnp.float32)
    ba = jax.random.uniform(keys[5], (1, H), minval=-bnd, maxval=bnd, dtype=jnp.float32)
    wb = jax.random.uniform(keys[6], (H, 1), minval=-bnd, maxval=bnd, dtype=jnp.float32)
    bb = jax.random.uniform(keys[7], (1, 1), minval=-bnd, maxval=bnd, dtype=jnp.float32)

    # knowledge graph edges
    edge_index = jax.random.randint(keys[8], (2, E), 0, num_entities, dtype=jnp.int32)
    edge_type = jax.random.randint(keys[9], (E,), 0, num_relations, dtype=jnp.int32)

    # get_node_embeds: RGCN encode + append zero special-token row
    kg_nodes = rgcn_conv(node_embeds_param, edge_index, edge_type,
                         basis, comp, root, bias, num_relations)
    node_embeds_full = jnp.concatenate(
        [kg_nodes, jnp.zeros((1, H), dtype=jnp.float32)], axis=0)   # (256, H)

    # batch inputs
    entity_ids = jax.random.randint(keys[10], (B, L), 0, N_total, dtype=jnp.int32)
    lengths = jnp.array([L, L // 2], dtype=jnp.int32)
    entity_mask = (jnp.arange(L)[None, :] < lengths[:, None]).astype(jnp.float32)
    labels = jax.random.randint(keys[11], (B, 1), 0, N_total, dtype=jnp.int32)

    # gather entity embeddings (glue, same as node_embeds[entity_ids])
    entity_embeds = node_embeds_full[entity_ids]                    # (B, L, H)

    # ---- run Pallas kernel ----
    logits, user_embeds, loss = kbrd_forward_pallas(
        entity_embeds, entity_mask, node_embeds_full, wa, ba, wb, bb, labels)
    jax.block_until_ready((logits, user_embeds, loss))

    # ---- numerical check against plain-JAX f32 reference (kernel uses bf16 node table) ----
    ref_logits, ref_user, ref_loss = reference_forward(
        entity_embeds, entity_mask, node_embeds_full, wa, ba, wb, bb, labels)
    np.testing.assert_allclose(np.asarray(logits), np.asarray(ref_logits),
                               rtol=5e-3, atol=5e-3)
    np.testing.assert_allclose(np.asarray(user_embeds), np.asarray(ref_user),
                               rtol=5e-3, atol=5e-3)
    np.testing.assert_allclose(np.asarray(loss), np.asarray(ref_loss),
                               rtol=5e-3, atol=5e-3)

    print("KERNEL_OK")
</pallas_src>

<mosaic_0001>
module attributes {stable_mosaic.version = 11 : i64} {
  func.func @kbrd_kernel(%arg0: i32, %arg1: memref<8x8x128xf32, #tpu.memory_space<vmem>>, %arg2: memref<8x8xf32, #tpu.memory_space<vmem>>, %arg3: memref<8x128xbf16, #tpu.memory_space<vmem>>, %arg4: memref<256x128xbf16, #tpu.memory_space<vmem>>, %arg5: memref<128x128xf32, #tpu.memory_space<vmem>>, %arg6: memref<1x128xf32, #tpu.memory_space<vmem>>, %arg7: memref<128x1xf32, #tpu.memory_space<vmem>>, %arg8: memref<1x1xf32, #tpu.memory_space<vmem>>, %arg9: memref<8x256xf32, #tpu.memory_space<vmem>>, %arg10: memref<8x128xf32, #tpu.memory_space<vmem>>, %arg11: memref<8x1xf32, #tpu.memory_space<vmem>>, %arg12: memref<8x128xbf16, #tpu.memory_space<vmem>>, %arg13: memref<8x1xf32, #tpu.memory_space<vmem>>, %arg14: memref<8x1xf32, #tpu.memory_space<vmem>>, %arg15: memref<8x1xf32, #tpu.memory_space<vmem>>) attributes {dimension_semantics = [#tpu.dimension_semantics<arbitrary>], iteration_bounds = array<i64: 1>, scalar_prefetch = 0 : i64, scratch_operands = 4 : i64, tpu.core_type = #tpu.core_type<tc>, window_params = [{pipeline_mode = #tpu.pipeline_mode<synchronous>, transform_indices = @transform_0, window_bounds = array<i64: 8, 8, 128>}, {pipeline_mode = #tpu.pipeline_mode<synchronous>, transform_indices = @transform_1, window_bounds = array<i64: 8, 8>}, {pipeline_mode = #tpu.pipeline_mode<synchronous>, transform_indices = @transform_2, window_bounds = array<i64: 8, 128>}, {transform_indices = @transform_3, window_bounds = array<i64: 256, 128>}, {pipeline_mode = #tpu.pipeline_mode<synchronous>, transform_indices = @transform_4, window_bounds = array<i64: 128, 128>}, {pipeline_mode = #tpu.pipeline_mode<synchronous>, transform_indices = @transform_5, window_bounds = array<i64: 1, 128>}, {pipeline_mode = #tpu.pipeline_mode<synchronous>, transform_indices = @transform_6, window_bounds = array<i64: 128, 1>}, {pipeline_mode = #tpu.pipeline_mode<synchronous>, transform_indices = @transform_7, window_bounds = array<i64: 1, 1>}, {transform_indices = @transform_8, window_bounds = array<i64: 8, 256>}, {pipeline_mode = #tpu.pipeline_mode<synchronous>, transform_indices = @transform_9, window_bounds = array<i64: 8, 128>}, {pipeline_mode = #tpu.pipeline_mode<synchronous>, transform_indices = @transform_10, window_bounds = array<i64: 8, 1>}]} {
    %c0_i32 = arith.constant 0 : i32
    %0 = arith.cmpi eq, %arg0, %c0_i32 : i32
    %1 = arith.extui %0 : i1 to i32
    %c0_i32_0 = arith.constant 0 : i32
    %2 = arith.cmpi ne, %1, %c0_i32_0 : i32
    scf.if %2 {
      %c0_18 = arith.constant 0 : index
      %c0_19 = arith.constant 0 : index
      %c0_20 = arith.constant 0 : index
      %26 = vector.load %arg1[%c0_18, %c0_19, %c0_20] : memref<8x8x128xf32, #tpu.memory_space<vmem>>, vector<8x8x128xf32>
      %27 = vector.shape_cast %26 : vector<8x8x128xf32> to vector<64x128xf32>
      %c0_21 = arith.constant 0 : index
      %c0_22 = arith.constant 0 : index
      %28 = vector.load %arg5[%c0_21, %c0_22] : memref<128x128xf32, #tpu.memory_space<vmem>>, vector<128x128xf32>
      %cst_23 = arith.constant dense<0.000000e+00> : vector<64x128xf32>
      %29 = tpu.matmul %27, %28, %cst_23 {dimension_numbers = #tpu.dot_dimension_numbers<[1], [0], [0], [1], [0, 0, 1, 1], [], []>} : vector<64x128xf32>, vector<128x128xf32>, vector<64x128xf32> -> vector<64x128xf32>
      %c0_24 = arith.constant 0 : index
      %c0_25 = arith.constant 0 : index
      %30 = vector.load %arg6[%c0_24, %c0_25] : memref<1x128xf32, #tpu.memory_space<vmem>>, vector<1x128xf32>
      %31 = vector.broadcast %30 : vector<1x128xf32> to vector<64x128xf32>
      %32 = arith.addf %29, %31 : vector<64x128xf32>
      %33 = math.tanh %32 : vector<64x128xf32>
      %c0_26 = arith.constant 0 : index
      %c0_27 = arith.constant 0 : index
      %34 = vector.load %arg7[%c0_26, %c0_27] : memref<128x1xf32, #tpu.memory_space<vmem>>, vector<128x1xf32>
      %cst_28 = arith.constant dense<0.000000e+00> : vector<64x1xf32>
      %35 = tpu.matmul %33, %34, %cst_28 {dimension_numbers = #tpu.dot_dimension_numbers<[1], [0], [0], [1], [0, 0, 1, 1], [], []>} : vector<64x128xf32>, vector<128x1xf32>, vector<64x1xf32> -> vector<64x1xf32>
      %c0_29 = arith.constant 0 : index
      %c0_30 = arith.constant 0 : index
      %36 = vector.load %arg8[%c0_29, %c0_30] : memref<1x1xf32, #tpu.memory_space<vmem>>, vector<1x1xf32>
      %37 = vector.broadcast %36 : vector<1x1xf32> to vector<64x1xf32>
      %38 = arith.addf %35, %37 : vector<64x1xf32>
      %39 = vector.shape_cast %38 : vector<64x1xf32> to vector<8x8xf32>
      %c0_31 = arith.constant 0 : index
      %c0_32 = arith.constant 0 : index
      %40 = vector.load %arg2[%c0_31, %c0_32] : memref<8x8xf32, #tpu.memory_space<vmem>>, vector<8x8xf32>
      %cst_33 = arith.constant 0.000000e+00 : f32
      %41 = vector.broadcast %cst_33 : f32 to vector<8x8xf32>
      %42 = arith.cmpf ogt, %40, %41 : vector<8x8xf32>
      %cst_34 = arith.constant -3.40282347E+38 : f32
      %43 = vector.broadcast %cst_34 : f32 to vector<8x8xf32>
      %44 = arith.select %42, %39, %43 : vector<8x8xi1>, vector<8x8xf32>
      %cst_35 = arith.constant dense<0xFF800000> : vector<8xf32>
      %45 = vector.multi_reduction <maximumf>, %44, %cst_35 [1] : vector<8x8xf32> to vector<8xf32>
      %46 = vector.shape_cast %45 : vector<8xf32> to vector<8x1xf32>
      %47 = vector.broadcast %46 : vector<8x1xf32> to vector<8x8xf32>
      %48 = arith.subf %44, %47 : vector<8x8xf32>
      %49 = math.exp %48 : vector<8x8xf32>
      %cst_36 = arith.constant dense<0.000000e+00> : vector<8xf32>
      %50 = vector.multi_reduction <add>, %49, %cst_36 [1] : vector<8x8xf32> to vector<8xf32>
      %51 = vector.shape_cast %50 : vector<8xf32> to vector<8x1xf32>
      %52 = vector.broadcast %51 : vector<8x1xf32> to vector<8x8xf32>
      %53 = arith.divf %49, %52 : vector<8x8xf32>
      %54 = vector.shape_cast %53 : vector<8x8xf32> to vector<8x8x1xf32>
      %55 = vector.broadcast %54 : vector<8x8x1xf32> to vector<8x8x128xf32>
      %56 = arith.mulf %55, %26 : vector<8x8x128xf32>
      %cst_37 = arith.constant dense<0.000000e+00> : vector<8x128xf32>
      %57 = vector.multi_reduction <add>, %56, %cst_37 [1] : vector<8x8x128xf32> to vector<8x128xf32>
      %c0_38 = arith.constant 0 : index
      %c0_39 = arith.constant 0 : index
      %58 = vector.load %arg10[%c0_38, %c0_39] : memref<8x128xf32, #tpu.memory_space<vmem>>, vector<8x128xf32>
      tpu.vector_store %arg10[%c0_38, %c0_39], %57 {strides = array<i32>} : memref<8x128xf32, #tpu.memory_space<vmem>>, vector<8x128xf32>,
      %59 = arith.truncf %57 : vector<8x128xf32> to vector<8x128xbf16>
      %c0_40 = arith.constant 0 : index
      %c0_41 = arith.constant 0 : index
      %60 = vector.load %arg12[%c0_40, %c0_41] : memref<8x128xbf16, #tpu.memory_space<vmem>>, vector<8x128xbf16>
      tpu.vector_store %arg12[%c0_40, %c0_41], %59 {strides = array<i32>} : memref<8x128xbf16, #tpu.memory_space<vmem>>, vector<8x128xbf16>,
      %c0_42 = arith.constant 0 : index
      %c0_43 = arith.constant 0 : index
      %61 = vector.load %arg3[%c0_42, %c0_43] : memref<8x128xbf16, #tpu.memory_space<vmem>>, vector<8x128xbf16>
      %62 = arith.extf %61 : vector<8x128xbf16> to vector<8x128xf32>
      %63 = arith.mulf %57, %62 : vector<8x128xf32>
      %cst_44 = arith.constant dense<0.000000e+00> : vector<8xf32>
      %64 = vector.multi_reduction <add>, %63, %cst_44 [1] : vector<8x128xf32> to vector<8xf32>
      %65 = vector.shape_cast %64 : vector<8xf32> to vector<8x1xf32>
      %c0_45 = arith.constant 0 : index
      %c0_46 = arith.constant 0 : index
      %66 = vector.load %arg15[%c0_45, %c0_46] : memref<8x1xf32, #tpu.memory_space<vmem>>, vector<8x1xf32>
      tpu.vector_store %arg15[%c0_45, %c0_46], %65 {strides = array<i32>} : memref<8x1xf32, #tpu.memory_space<vmem>>, vector<8x1xf32>,
      %cst_47 = arith.constant 0xFF800000 : f32
      %67 = vector.broadcast %cst_47 : f32 to vector<8x1xf32>
      %c0_48 = arith.constant 0 : index
      %c0_49 = arith.constant 0 : index
      %68 = vector.load %arg13[%c0_48, %c0_49] : memref<8x1xf32, #tpu.memory_space<vmem>>, vector<8x1xf32>
      tpu.vector_store %arg13[%c0_48, %c0_49], %67 {strides = array<i32>} : memref<8x1xf32, #tpu.memory_space<vmem>>, vector<8x1xf32>,
      %cst_50 = arith.constant 0.000000e+00 : f32
      %69 = vector.broadcast %cst_50 : f32 to vector<8x1xf32>
      %c0_51 = arith.constant 0 : index
      %c0_52 = arith.constant 0 : index
      %70 = vector.load %arg14[%c0_51, %c0_52] : memref<8x1xf32, #tpu.memory_space<vmem>>, vector<8x1xf32>
      tpu.vector_store %arg14[%c0_51, %c0_52], %69 {strides = array<i32>} : memref<8x1xf32, #tpu.memory_space<vmem>>, vector<8x1xf32>,
    } else {
    }
    %c0 = arith.constant 0 : index
    %c0_1 = arith.constant 0 : index
    %3 = vector.load %arg4[%c0, %c0_1] : memref<256x128xbf16, #tpu.memory_space<vmem>>, vector<256x128xbf16>
    %c0_2 = arith.constant 0 : index
    %c0_3 = arith.constant 0 : index
    %4 = vector.load %arg12[%c0_2, %c0_3] : memref<8x128xbf16, #tpu.memory_space<vmem>>, vector<8x128xbf16>
    %cst = arith.constant dense<0.000000e+00> : vector<8x256xf32>
    %5 = tpu.matmul %4, %3, %cst {dimension_numbers = #tpu.dot_dimension_numbers<[1], [1], [0], [0], [0, 0, 1, 0], [], []>} : vector<8x128xbf16>, vector<256x128xbf16>, vector<8x256xf32> -> vector<8x256xf32>
    %c0_4 = arith.constant 0 : index
    %c0_5 = arith.constant 0 : index
    %6 = vector.load %arg9[%c0_4, %c0_5] : memref<8x256xf32, #tpu.memory_space<vmem>>, vector<8x256xf32>
    tpu.vector_store %arg9[%c0_4, %c0_5], %5 {strides = array<i32>} : memref<8x256xf32, #tpu.memory_space<vmem>>, vector<8x256xf32>,
    %c0_6 = arith.constant 0 : index
    %c0_7 = arith.constant 0 : index
    %7 = vector.load %arg13[%c0_6, %c0_7] : memref<8x1xf32, #tpu.memory_space<vmem>>, vector<8x1xf32>
    %cst_8 = arith.constant dense<0xFF800000> : vector<8xf32>
    %8 = vector.multi_reduction <maximumf>, %5, %cst_8 [1] : vector<8x256xf32> to vector<8xf32>
    %9 = vector.shape_cast %8 : vector<8xf32> to vector<8x1xf32>
    %10 = arith.maximumf %7, %9 : vector<8x1xf32>
    %c0_9 = arith.constant 0 : index
    %c0_10 = arith.constant 0 : index
    %11 = vector.load %arg14[%c0_9, %c0_10] : memref<8x1xf32, #tpu.memory_space<vmem>>, vector<8x1xf32>
    %12 = arith.subf %7, %10 : vector<8x1xf32>
    %13 = math.exp %12 : vector<8x1xf32>
    %14 = arith.mulf %11, %13 : vector<8x1xf32>
    %15 = vector.broadcast %10 : vector<8x1xf32> to vector<8x256xf32>
    %16 = arith.subf %5, %15 : vector<8x256xf32>
    %17 = math.exp %16 : vector<8x256xf32>
    %cst_11 = arith.constant dense<0.000000e+00> : vector<8xf32>
    %18 = vector.multi_reduction <add>, %17, %cst_11 [1] : vector<8x256xf32> to vector<8xf32>
    %19 = vector.shape_cast %18 : vector<8xf32> to vector<8x1xf32>
    %20 = arith.addf %14, %19 : vector<8x1xf32>
    %c0_12 = arith.constant 0 : index
    %c0_13 = arith.constant 0 : index
    %21 = vector.load %arg14[%c0_12, %c0_13] : memref<8x1xf32, #tpu.memory_space<vmem>>, vector<8x1xf32>
    tpu.vector_store %arg14[%c0_12, %c0_13], %20 {strides = array<i32>} : memref<8x1xf32, #tpu.memory_space<vmem>>, vector<8x1xf32>,
    %c0_14 = arith.constant 0 : index
    %c0_15 = arith.constant 0 : index
    %22 = vector.load %arg13[%c0_14, %c0_15] : memref<8x1xf32, #tpu.memory_space<vmem>>, vector<8x1xf32>
    tpu.vector_store %arg13[%c0_14, %c0_15], %10 {strides = array<i32>} : memref<8x1xf32, #tpu.memory_space<vmem>>, vector<8x1xf32>,
    %c0_i32_16 = arith.constant 0 : i32
    %23 = arith.cmpi eq, %arg0, %c0_i32_16 : i32
    %24 = arith.extui %23 : i1 to i32
    %c0_i32_17 = arith.constant 0 : i32
    %25 = arith.cmpi ne, %24, %c0_i32_17 : i32
    scf.if %25 {
      %c0_18 = arith.constant 0 : index
      %c0_19 = arith.constant 0 : index
      %26 = vector.load %arg13[%c0_18, %c0_19] : memref<8x1xf32, #tpu.memory_space<vmem>>, vector<8x1xf32>
      %c0_20 = arith.constant 0 : index
      %c0_21 = arith.constant 0 : index
      %27 = vector.load %arg14[%c0_20, %c0_21] : memref<8x1xf32, #tpu.memory_space<vmem>>, vector<8x1xf32>
      %28 = math.log %27 : vector<8x1xf32>
      %29 = arith.addf %26, %28 : vector<8x1xf32>
      %c0_22 = arith.constant 0 : index
      %c0_23 = arith.constant 0 : index
      %30 = vector.load %arg15[%c0_22, %c0_23] : memref<8x1xf32, #tpu.memory_space<vmem>>, vector<8x1xf32>
      %31 = arith.subf %29, %30 : vector<8x1xf32>
      %c0_24 = arith.constant 0 : index
      %c0_25 = arith.constant 0 : index
      %32 = vector.load %arg11[%c0_24, %c0_25] : memref<8x1xf32, #tpu.memory_space<vmem>>, vector<8x1xf32>
      tpu.vector_store %arg11[%c0_24, %c0_25], %31 {strides = array<i32>} : memref<8x1xf32, #tpu.memory_space<vmem>>, vector<8x1xf32>,
    } else {
    }
    return
  }
  func.func @transform_0(%arg0: i32) -> (i32, i32, i32) {
    %c0_i32 = arith.constant 0 : i32
    %c0_i32_0 = arith.constant 0 : i32
    %c0_i32_1 = arith.constant 0 : i32
    %c0_i32_2 = arith.constant 0 : i32
    return %c0_i32, %c0_i32_0, %c0_i32_1 : i32, i32, i32
  }
  func.func @transform_1(%arg0: i32) -> (i32, i32) {
    %c0_i32 = arith.constant 0 : i32
    %c0_i32_0 = arith.constant 0 : i32
    %c0_i32_1 = arith.constant 0 : i32
    return %c0_i32, %c0_i32_0 : i32, i32
  }
  func.func @transform_2(%arg0: i32) -> (i32, i32) {
    %c0_i32 = arith.constant 0 : i32
    %c0_i32_0 = arith.constant 0 : i32
    %c0_i32_1 = arith.constant 0 : i32
    return %c0_i32, %c0_i32_0 : i32, i32
  }
  func.func @transform_3(%arg0: i32) -> (i32, i32) {
    %c0_i32 = arith.constant 0 : i32
    %c0_i32_0 = arith.constant 0 : i32
    return %arg0, %c0_i32 : i32, i32
  }
  func.func @transform_4(%arg0: i32) -> (i32, i32) {
    %c0_i32 = arith.constant 0 : i32
    %c0_i32_0 = arith.constant 0 : i32
    %c0_i32_1 = arith.constant 0 : i32
    return %c0_i32, %c0_i32_0 : i32, i32
  }
  func.func @transform_5(%arg0: i32) -> (i32, i32) {
    %c0_i32 = arith.constant 0 : i32
    %c0_i32_0 = arith.constant 0 : i32
    %c0_i32_1 = arith.constant 0 : i32
    return %c0_i32, %c0_i32_0 : i32, i32
  }
  func.func @transform_6(%arg0: i32) -> (i32, i32) {
    %c0_i32 = arith.constant 0 : i32
    %c0_i32_0 = arith.constant 0 : i32
    %c0_i32_1 = arith.constant 0 : i32
    return %c0_i32, %c0_i32_0 : i32, i32
  }
  func.func @transform_7(%arg0: i32) -> (i32, i32) {
    %c0_i32 = arith.constant 0 : i32
    %c0_i32_0 = arith.constant 0 : i32
    %c0_i32_1 = arith.constant 0 : i32
    return %c0_i32, %c0_i32_0 : i32, i32
  }
  func.func @transform_8(%arg0: i32) -> (i32, i32) {
    %c0_i32 = arith.constant 0 : i32
    %c0_i32_0 = arith.constant 0 : i32
    return %c0_i32, %arg0 : i32, i32
  }
  func.func @transform_9(%arg0: i32) -> (i32, i32) {
    %c0_i32 = arith.constant 0 : i32
    %c0_i32_0 = arith.constant 0 : i32
    %c0_i32_1 = arith.constant 0 : i32
    return %c0_i32, %c0_i32_0 : i32, i32
  }
  func.func @transform_10(%arg0: i32) -> (i32, i32) {
    %c0_i32 = arith.constant 0 : i32
    %c0_i32_0 = arith.constant 0 : i32
    %c0_i32_1 = arith.constant 0 : i32
    return %c0_i32, %c0_i32_0 : i32, i32
  }
}

</mosaic_0001>

<llo_original>
// kernel: tpu_custom_call.1
$region0: #{tpu_custom_call.1}
  #allocation0 [shape = 'u32[]', space=smem, size = 0x4, offset = 0x4, fixed_abs, tag = 'smem constant byte address 0x4 - core index']
  #allocation1 [shape = 'u32[144,128]{1,0:T(1,128)}', space=vmem, size = 0x12000, scoped, tag = 'internal scratch']
  #allocation2 [shape = 'bf16[8,128]{1,0:T(8,128)(2,1)}', space=vmem, size = 0x800, scoped, tag = 'scratch operand']
  #allocation3 [shape = 'f32[8,1]{1,0:T(8,128)}', space=vmem, size = 0x1000, scoped, tag = 'scratch operand']
  #allocation4 [shape = 'f32[8,1]{1,0:T(8,128)}', space=vmem, size = 0x1000, scoped, tag = 'scratch operand']
  #allocation5 [shape = 'f32[8,1]{1,0:T(8,128)}', space=vmem, size = 0x1000, scoped, tag = 'scratch operand']
  #allocation6 [shape = 'f32[1,1]{1,0:T(1,128)S(1)}', space=vmem, size = 0x200, scoped, tag = 'scoped memory for tpu_custom_call.1']
  %s0 = inlined_call_operand.hbm [shape: f32[8,8,128], index: 0, kind: input, shape index: {}]
  %s1 = inlined_call_operand.vmem [shape: f32[8,8], index: 1, kind: input, shape index: {}]
  %s2 = inlined_call_operand.vmem [shape: bf16[8,128], index: 2, kind: input, shape index: {}]
  %s3 = inlined_call_operand.vmem [shape: bf16[256,128], index: 3, kind: input, shape index: {}]
  %s4 = inlined_call_operand.hbm [shape: f32[128,128], index: 4, kind: input, shape index: {}]
  %s5 = inlined_call_operand.vmem [shape: f32[1,128], index: 5, kind: input, shape index: {}]
  %s6 = inlined_call_operand.vmem [shape: f32[128,1], index: 6, kind: input, shape index: {}]
  %s7 = inlined_call_operand.<no memory space> [shape: f32[1,1], index: 7, kind: input, shape index: {}]
  %s8 = inlined_call_operand.hbm [shape: f32[8,256], index: 8, kind: output, shape index: {0}]
  %s9 = inlined_call_operand.hbm [shape: f32[8,128], index: 9, kind: output, shape index: {1}]
  %s10 = inlined_call_operand.vmem [shape: f32[8,1], index: 10, kind: output, shape index: {2}]
  %11 = xla_tuple %s8, %s9, %s10
  %s12 = sld [smem:[#allocation0]]
  $region74: #{tpu_custom_call.1} parent=0
    _
  %s14 = ssub.s32 1, %s12
  %s15 = scalar_select 0, %s14, %s12
  %v16 = vstv %s7
  %17 = vst [vmem:[#allocation6] sm:$0x1] %v16
  $region1: #{tpu_custom_call.1} parent=0
    #allocation7 [shape = 'u8[32768]{0}', space=vmem, size = 0x8000, scoped, tag = 'input window, operand 0, single buffered']
    #allocation8 [shape = 's32[1]{0}', space=sflag, size = 0x4, scoped, tag = 'scoped memory for tpu_custom_call.1']
    #allocation9 [shape = 's32[1]{0}', space=sflag, size = 0x4, scoped, tag = 'scoped memory for tpu_custom_call.1']
    #allocation10 [shape = 'u8[65536]{0}', space=vmem, size = 0x10000, scoped, tag = 'input window, operand 4, single buffered']
    #allocation11 [shape = 's32[1]{0}', space=sflag, size = 0x4, scoped, tag = 'scoped memory for tpu_custom_call.1']
    #allocation12 [shape = 'u8[8192]{0}', space=vmem, size = 0x2000, scoped, tag = 'output window, operand 0, single buffered']
    #allocation13 [shape = 'u8[4096]{0}', space=vmem, size = 0x1000, scoped, tag = 'output window, operand 1, single buffered']
    #allocation14 [shape = 's32[1]{0}', space=sflag, size = 0x4, scoped, tag = 'scoped memory for tpu_custom_call.1']
    %18 = vsyncpa [#allocation8], 0
    %19 = vsyncpa [#allocation11], 0
    %20 = vsyncpa [#allocation9], 0
    %21 = vsyncpa [#allocation14], 0
    // Predicated region
    $region2: #{tpu_custom_call.1} parent=1 // pred_check
      _
    $region3: #{tpu_custom_call.1} parent=1 // pred_check_branch
      %23 = sbr.rel (0) target = $region5
    $region4: #{tpu_custom_call.1} parent=1 // pred_region
      %s25 = ssub.s32 1024, 1024
      %26 = vsyncadd [#allocation8], %s25
      %s27 = sshll.u32 [#allocation7], 4
      %s28 = int_to_ptr.vmem [resolvable:$true] %s27
      %33 = dma.hbm_to_vmem [thread:$0]  %s0, 1024, %s28, [#allocation8], 128, 128, 8
    $region5: #{tpu_custom_call.1} parent=1 // pred_fallthru
      _
    // Predicated region
    $region6: #{tpu_custom_call.1} parent=1 // pred_check
      _
    $region7: #{tpu_custom_call.1} parent=1 // pred_check_branch
      %35 = sbr.rel (0) target = $region9
    $region8: #{tpu_custom_call.1} parent=1 // pred_region
      _
    $region9: #{tpu_custom_call.1} parent=1 // pred_fallthru
      _
    // Predicated region
    $region10: #{tpu_custom_call.1} parent=1 // pred_check
      _
    $region11: #{tpu_custom_call.1} parent=1 // pred_check_branch
      %37 = sbr.rel (0) target = $region13
    $region12: #{tpu_custom_call.1} parent=1 // pred_region
      _
    $region13: #{tpu_custom_call.1} parent=1 // pred_fallthru
      _
    // Predicated region
    $region14: #{tpu_custom_call.1} parent=1 // pred_check
      _
    $region15: #{tpu_custom_call.1} parent=1 // pred_check_branch
      %39 = sbr.rel (0) target = $region17
    $region16: #{tpu_custom_call.1} parent=1 // pred_region
      _
    $region17: #{tpu_custom_call.1} parent=1 // pred_fallthru
      _
    // Predicated region
    $region18: #{tpu_custom_call.1} parent=1 // pred_check
      _
    $region19: #{tpu_custom_call.1} parent=1 // pred_check_branch
      %41 = sbr.rel (0) target = $region21
    $region20: #{tpu_custom_call.1} parent=1 // pred_region
      %s43 = ssub.s32 2048, 2048
      %44 = vsyncadd [#allocation11], %s43
      %s45 = sshll.u32 [#allocation10], 4
      %s46 = int_to_ptr.vmem [resolvable:$true] %s45
      %51 = dma.hbm_to_vmem [thread:$0]  %s4, 2048, %s46, [#allocation11], 128, 128, 8
    $region21: #{tpu_custom_call.1} parent=1 // pred_fallthru
      _
    // Predicated region
    $region22: #{tpu_custom_call.1} parent=1 // pred_check
      _
    $region23: #{tpu_custom_call.1} parent=1 // pred_check_branch
      %53 = sbr.rel (0) target = $region25
    $region24: #{tpu_custom_call.1} parent=1 // pred_region
      _
    $region25: #{tpu_custom_call.1} parent=1 // pred_fallthru
      _
    // Predicated region
    $region26: #{tpu_custom_call.1} parent=1 // pred_check
      _
    $region27: #{tpu_custom_call.1} parent=1 // pred_check_branch
      %55 = sbr.rel (0) target = $region29
    $region28: #{tpu_custom_call.1} parent=1 // pred_region
      _
    $region29: #{tpu_custom_call.1} parent=1 // pred_fallthru
      _
    // Predicated region
    $region30: #{tpu_custom_call.1} parent=1 // pred_check
      _
    $region31: #{tpu_custom_call.1} parent=1 // pred_check_branch
      %57 = sbr.rel (0) target = $region33
    $region32: #{tpu_custom_call.1} parent=1 // pred_region
      _
    $region33: #{tpu_custom_call.1} parent=1 // pred_fallthru
      _
    // Predicated region
    $region34: #{tpu_custom_call.1} parent=1 // pred_check
      _
    $region35: #{tpu_custom_call.1} parent=1 // pred_check_branch
      %59 = sbr.rel (0) target = $region37
    $region36: #{tpu_custom_call.1} parent=1 // pred_region
      %60 = dma.done [#allocation8], 1024
    $region37: #{tpu_custom_call.1} parent=1 // pred_fallthru
      _
    // Predicated region
    $region38: #{tpu_custom_call.1} parent=1 // pred_check
      _
    $region39: #{tpu_custom_call.1} parent=1 // pred_check_branch
      %62 = sbr.rel (0) target = $region41
    $region40: #{tpu_custom_call.1} parent=1 // pred_region
      %63 = dma.done [#allocation11], 2048
    $region41: #{tpu_custom_call.1} parent=1 // pred_fallthru
      _
    %p65 = scmp.eq.s32.totalorder 0, 0
    // Predicated region
    $region42: #{tpu_custom_call.1} parent=1 // pred_check
      %p66 = pneg %p65
    $region43: #{tpu_custom_call.1} parent=1 // pred_check_branch
      %68 = sbr.rel (%p66) target = $region45
    $region44: #{tpu_custom_call.1} parent=1 // pred_region
      %v69 = vld [vmem:[#allocation7] sm:$0xff]
      %v70 = vld [vmem:[#allocation7 + $0x8] sm:$0xff]
      %v71 = vld [vmem:[#allocation7 + $0x10] sm:$0xff]
      %v72 = vld [vmem:[#allocation7 + $0x18] sm:$0xff]
      %v73 = vld [vmem:[#allocation7 + $0x20] sm:$0xff]
      %v74 = vld [vmem:[#allocation7 + $0x28] sm:$0xff]
      %v75 = vld [vmem:[#allocation7 + $0x30] sm:$0xff]
      %v76 = vld [vmem:[#allocation7 + $0x38] sm:$0xff]
      %v77 = vld [vmem:[#allocation10] sm:$0xff]
      %v78 = vld [vmem:[#allocation10 + $0x8] sm:$0xff]
      %v79 = vld [vmem:[#allocation10 + $0x10] sm:$0xff]
      %v80 = vld [vmem:[#allocation10 + $0x18] sm:$0xff]
      %v81 = vld [vmem:[#allocation10 + $0x20] sm:$0xff]
      %v82 = vld [vmem:[#allocation10 + $0x28] sm:$0xff]
      %v83 = vld [vmem:[#allocation10 + $0x30] sm:$0xff]
      %v84 = vld [vmem:[#allocation10 + $0x38] sm:$0xff]
      %v85 = vld [vmem:[#allocation10 + $0x40] sm:$0xff]
      %v86 = vld [vmem:[#allocation10 + $0x48] sm:$0xff]
      %v87 = vld [vmem:[#allocation10 + $0x50] sm:$0xff]
      %v88 = vld [vmem:[#allocation10 + $0x58] sm:$0xff]
      %v89 = vld [vmem:[#allocation10 + $0x60] sm:$0xff]
      %v90 = vld [vmem:[#allocation10 + $0x68] sm:$0xff]
      %v91 = vld [vmem:[#allocation10 + $0x70] sm:$0xff]
      %v92 = vld [vmem:[#allocation10 + $0x78] sm:$0xff]
      %v93 = vld [vmem:[%s5] sm:$0x1]
      %v95 = vlaneseq
      %v96 = vshrl.u32 %v95, 7
      %v97 = vsub.s32 0, %v96
      %v98 = vrot.slane %v93, %v97
      %100 = vmatprep.subr.mxu0 0.0
      %101 = vmatpush1.msra.mxu0 %v77
      %102 = vmatprep.subr.mxu0 0.0
      %103 = vmatpush1.msra.mxu0 %v78
      %104 = vmatprep.subr.mxu0 0.0
      %105 = vmatpush1.msra.mxu0 %v79
      %106 = vmatprep.subr.mxu0 0.0
      %107 = vmatpush1.msra.mxu0 %v80
      %108 = vmatprep.subr.mxu0 0.0
      %109 = vmatpush1.msra.mxu0 %v81
      %110 = vmatprep.subr.mxu0 0.0
      %111 = vmatpush1.msra.mxu0 %v82
      %112 = vmatprep.subr.mxu0 0.0
      %113 = vmatpush1.msra.mxu0 %v83
      %114 = vmatprep.subr.mxu0 0.0
      %115 = vmatpush1.msra.mxu0 %v84
      %116 = vmatprep.subr.mxu0 0.0
      %117 = vmatpush1.msra.mxu0 %v85
      %118 = vmatprep.subr.mxu0 0.0
      %119 = vmatpush1.msra.mxu0 %v86
      %120 = vmatprep.subr.mxu0 0.0
      %121 = vmatpush1.msra.mxu0 %v87
      %122 = vmatprep.subr.mxu0 0.0
      %123 = vmatpush1.msra.mxu0 %v88
      %124 = vmatprep.subr.mxu0 0.0
      %125 = vmatpush1.msra.mxu0 %v89
      %126 = vmatprep.subr.mxu0 0.0
      %127 = vmatpush1.msra.mxu0 %v90
      %128 = vmatprep.subr.mxu0 0.0
      %129 = vmatpush1.msra.mxu0 %v91
      %130 = vmatprep.subr.mxu0 0.0
      %131 = vmatpush1.msra.mxu0 %v92
      %132 = vmatprep.subr.mxu0 0.0
      %133 = vmatpush1.msra.mxu0 0.0
      %134 = vmatprep.subr.mxu0 0.0
      %135 = vmatpush1.msra.mxu0 0.0
      %136 = vmatprep.subr.mxu0 0.0
      %137 = vmatpush1.msra.mxu0 0.0
      %138 = vmatprep.subr.mxu0 0.0
      %139 = vmatpush1.msra.mxu0 0.0
      %140 = vmatprep.subr.mxu0 0.0
      %141 = vmatpush1.msra.mxu0 0.0
      %142 = vmatprep.subr.mxu0 0.0
      %143 = vmatpush1.msra.mxu0 0.0
      %144 = vmatprep.subr.mxu0 0.0
      %145 = vmatpush1.msra.mxu0 0.0
      %146 = vmatprep.subr.mxu0 0.0
      %147 = vmatpush1.msra.mxu0 0.0
      %148 = vmatprep.subr.mxu0 0.0
      %149 = vmatpush1.msra.mxu0 0.0
      %150 = vmatprep.subr.mxu0 0.0
      %151 = vmatpush1.msra.mxu0 0.0
      %152 = vmatprep.subr.mxu0 0.0
      %153 = vmatpush1.msra.mxu0 0.0
      %154 = vmatprep.subr.mxu0 0.0
      %155 = vmatpush1.msra.mxu0 0.0
      %156 = vmatprep.subr.mxu0 0.0
      %157 = vmatpush1.msra.mxu0 0.0
      %158 = vmatprep.subr.mxu0 0.0
      %159 = vmatpush1.msra.mxu0 0.0
      %160 = vmatprep.subr.mxu0 0.0
      %161 = vmatpush1.msra.mxu0 0.0
      %162 = vmatprep.subr.mxu0 0.0
      %163 = vmatpush1.msra.mxu0 0.0
      %164 = vmatprep.mubr.f32.mxu0 0.0
      %165 = vmatmul.mubr.f32.gmra.mrb[0].mxu0 %v69
      %v166 = vpop.f32.mrb[0].mxu0
      %v167 = vadd.f32 %v98, %v166
      %v168 = vpop.f32.mrb[0].mxu0
      %169 = vmatprep.mubr.f32.mxu0 0.0
      %170 = vmatmul.mubr.f32.gmra.mrb[0].mxu0 %v70
      %v171 = vpop.f32.mrb[0].mxu0
      %v172 = vadd.f32 %v98, %v171
      %v173 = vpop.f32.mrb[0].mxu0
      %174 = vmatprep.mubr.f32.mxu0 0.0
      %175 = vmatmul.mubr.f32.gmra.mrb[0].mxu0 %v71
      %v176 = vpop.f32.mrb[0].mxu0
      %v177 = vadd.f32 %v98, %v176
      %v178 = vpop.f32.mrb[0].mxu0
      %179 = vmatprep.mubr.f32.mxu0 0.0
      %180 = vmatmul.mubr.f32.gmra.mrb[0].mxu0 %v72
      %v181 = vpop.f32.mrb[0].mxu0
      %v182 = vadd.f32 %v98, %v181
      %v183 = vpop.f32.mrb[0].mxu0
      %184 = vmatprep.mubr.f32.mxu0 0.0
      %185 = vmatmul.mubr.f32.gmra.mrb[0].mxu0 %v73
      %v186 = vpop.f32.mrb[0].mxu0
      %v187 = vadd.f32 %v98, %v186
      %v188 = vpop.f32.mrb[0].mxu0
      %189 = vmatprep.mubr.f32.mxu0 0.0
      %190 = vmatmul.mubr.f32.gmra.mrb[0].mxu0 %v74
      %v191 = vpop.f32.mrb[0].mxu0
      %v192 = vadd.f32 %v98, %v191
      %v193 = vpop.f32.mrb[0].mxu0
      %194 = vmatprep.mubr.f32.mxu0 0.0
      %195 = vmatmul.mubr.f32.gmra.mrb[0].mxu0 %v75
      %v196 = vpop.f32.mrb[0].mxu0
      %v197 = vadd.f32 %v98, %v196
      %v198 = vpop.f32.mrb[0].mxu0
      %199 = vmatprep.mubr.f32.mxu0 0.0
      %200 = vmatmul.mubr.f32.gmra.mrb[0].mxu0 %v76
      %v201 = vpop.f32.mrb[0].mxu0
      %v202 = vadd.f32 %v98, %v201
      %v203 = vpop.f32.mrb[0].mxu0
      %204 = vdwg.mxu0
      %v205 = vtanh.pop %v167
      %v206 = vtanh.pop %v172
      %v207 = vtanh.pop %v177
      %v208 = vtanh.pop %v182
      %v209 = vtanh.pop %v187
      %v210 = vtanh.pop %v192
      %v211 = vtanh.pop %v197
      %v212 = vtanh.pop %v202
      %v213 = vld [vmem:[%s6] sm:$0xff]
      %v214 = vld [vmem:[%s6 + $0x8] sm:$0xff]
      %v215 = vld [vmem:[%s6 + $0x10] sm:$0xff]
      %v216 = vld [vmem:[%s6 + $0x18] sm:$0xff]
      %v217 = vld [vmem:[%s6 + $0x20] sm:$0xff]
      %v218 = vld [vmem:[%s6 + $0x28] sm:$0xff]
      %v219 = vld [vmem:[%s6 + $0x30] sm:$0xff]
      %v220 = vld [vmem:[%s6 + $0x38] sm:$0xff]
      %v221 = vld [vmem:[%s6 + $0x40] sm:$0xff]
      %v222 = vld [vmem:[%s6 + $0x48] sm:$0xff]
      %v223 = vld [vmem:[%s6 + $0x50] sm:$0xff]
      %v224 = vld [vmem:[%s6 + $0x58] sm:$0xff]
      %v225 = vld [vmem:[%s6 + $0x60] sm:$0xff]
      %v226 = vld [vmem:[%s6 + $0x68] sm:$0xff]
      %v227 = vld [vmem:[%s6 + $0x70] sm:$0xff]
      %v228 = vld [vmem:[%s6 + $0x78] sm:$0xff]
      %v229 = vld [vmem:[#allocation6] sm:$0x1]
      %v231 = vlaneseq
      %v232 = vshrl.u32 %v231, 7
      %v233 = vsub.s32 0, %v232
      %v234 = vrot.slane %v229, %v233
      %236 = vmatprep.subr.mxu0 0.0
      %237 = vmatpush1.msra.mxu0 %v213
      %238 = vmatprep.subr.mxu0 0.0
      %239 = vmatpush1.msra.mxu0 %v214
      %240 = vmatprep.subr.mxu0 0.0
      %241 = vmatpush1.msra.mxu0 %v215
      %242 = vmatprep.subr.mxu0 0.0
      %243 = vmatpush1.msra.mxu0 %v216
      %244 = vmatprep.subr.mxu0 0.0
      %245 = vmatpush1.msra.mxu0 %v217
      %246 = vmatprep.subr.mxu0 0.0
      %247 = vmatpush1.msra.mxu0 %v218
      %248 = vmatprep.subr.mxu0 0.0
      %249 = vmatpush1.msra.mxu0 %v219
      %250 = vmatprep.subr.mxu0 0.0
      %251 = vmatpush1.msra.mxu0 %v220
      %252 = vmatprep.subr.mxu0 0.0
      %253 = vmatpush1.msra.mxu0 %v221
      %254 = vmatprep.subr.mxu0 0.0
      %255 = vmatpush1.msra.mxu0 %v222
      %256 = vmatprep.subr.mxu0 0.0
      %257 = vmatpush1.msra.mxu0 %v223
      %258 = vmatprep.subr.mxu0 0.0
      %259 = vmatpush1.msra.mxu0 %v224
      %260 = vmatprep.subr.mxu0 0.0
      %261 = vmatpush1.msra.mxu0 %v225
      %262 = vmatprep.subr.mxu0 0.0
      %263 = vmatpush1.msra.mxu0 %v226
      %264 = vmatprep.subr.mxu0 0.0
      %265 = vmatpush1.msra.mxu0 %v227
      %266 = vmatprep.subr.mxu0 0.0
      %267 = vmatpush1.msra.mxu0 %v228
      %268 = vmatprep.subr.mxu0 0.0
      %269 = vmatpush1.msra.mxu0 0.0
      %270 = vmatprep.subr.mxu0 0.0
      %271 = vmatpush1.msra.mxu0 0.0
      %272 = vmatprep.subr.mxu0 0.0
      %273 = vmatpush1.msra.mxu0 0.0
      %274 = vmatprep.subr.mxu0 0.0
      %275 = vmatpush1.msra.mxu0 0.0
      %276 = vmatprep.subr.mxu0 0.0
      %277 = vmatpush1.msra.mxu0 0.0
      %278 = vmatprep.subr.mxu0 0.0
      %279 = vmatpush1.msra.mxu0 0.0
      %280 = vmatprep.subr.mxu0 0.0
      %281 = vmatpush1.msra.mxu0 0.0
      %282 = vmatprep.subr.mxu0 0.0
      %283 = vmatpush1.msra.mxu0 0.0
      %284 = vmatprep.subr.mxu0 0.0
      %285 = vmatpush1.msra.mxu0 0.0
      %286 = vmatprep.subr.mxu0 0.0
      %287 = vmatpush1.msra.mxu0 0.0
      %288 = vmatprep.subr.mxu0 0.0
      %289 = vmatpush1.msra.mxu0 0.0
      %290 = vmatprep.subr.mxu0 0.0
      %291 = vmatpush1.msra.mxu0 0.0
      %292 = vmatprep.subr.mxu0 0.0
      %293 = vmatpush1.msra.mxu0 0.0
      %294 = vmatprep.subr.mxu0 0.0
      %295 = vmatpush1.msra.mxu0 0.0
      %296 = vmatprep.subr.mxu0 0.0
      %297 = vmatpush1.msra.mxu0 0.0
      %298 = vmatprep.subr.mxu0 0.0
      %299 = vmatpush1.msra.mxu0 0.0
      %300 = vmatprep.mubr.f32.mxu0 0.0
      %301 = vmatmul.mubr.f32.gmra.mrb[0].mxu0 %v205
      %v302 = vpop.f32.mrb[0].mxu0
      %v303 = vadd.f32 %v234, %v302
      %v304 = vpop.f32.mrb[0].mxu0
      %305 = vmatprep.mubr.f32.mxu0 0.0
      %306 = vmatmul.mubr.f32.gmra.mrb[0].mxu0 %v206
      %v307 = vpop.f32.mrb[0].mxu0
      %v308 = vadd.f32 %v234, %v307
      %v309 = vpop.f32.mrb[0].mxu0
      %310 = vmatprep.mubr.f32.mxu0 0.0
      %311 = vmatmul.mubr.f32.gmra.mrb[0].mxu0 %v207
      %v312 = vpop.f32.mrb[0].mxu0
      %v313 = vadd.f32 %v234, %v312
      %v314 = vpop.f32.mrb[0].mxu0
      %315 = vmatprep.mubr.f32.mxu0 0.0
      %316 = vmatmul.mubr.f32.gmra.mrb[0].mxu0 %v208
      %v317 = vpop.f32.mrb[0].mxu0
      %v318 = vadd.f32 %v234, %v317
      %v319 = vpop.f32.mrb[0].mxu0
      %320 = vmatprep.mubr.f32.mxu0 0.0
      %321 = vmatmul.mubr.f32.gmra.mrb[0].mxu0 %v209
      %v322 = vpop.f32.mrb[0].mxu0
      %v323 = vadd.f32 %v234, %v322
      %v324 = vpop.f32.mrb[0].mxu0
      %325 = vmatprep.mubr.f32.mxu0 0.0
      %326 = vmatmul.mubr.f32.gmra.mrb[0].mxu0 %v210
      %v327 = vpop.f32.mrb[0].mxu0
      %v328 = vadd.f32 %v234, %v327
      %v329 = vpop.f32.mrb[0].mxu0
      %330 = vmatprep.mubr.f32.mxu0 0.0
      %331 = vmatmul.mubr.f32.gmra.mrb[0].mxu0 %v211
      %v332 = vpop.f32.mrb[0].mxu0
      %v333 = vadd.f32 %v234, %v332
      %v334 = vpop.f32.mrb[0].mxu0
      %335 = vmatprep.mubr.f32.mxu0 0.0
      %336 = vmatmul.mubr.f32.gmra.mrb[0].mxu0 %v212
      %v337 = vpop.f32.mrb[0].mxu0
      %v338 = vadd.f32 %v234, %v337
      %v339 = vpop.f32.mrb[0].mxu0
      %340 = vdwg.mxu0
      %v341 = vld [vmem:[%s1] sm:$0xff]
      %vm342 = vcmp.gt.f32.partialorder %v341, 0.0
      %351 = vset.pattern.permute.xlu0 0
      %352 = vperm.xlu0 %351, %v303
      %v353 = vpop.permute.xlu0 %352
      %354 = vset.pattern.permute.xlu0 0
      %355 = vperm.xlu0 %354, %v308
      %v356 = vpop.permute.xlu0 %355
      %357 = vset.pattern.permute.xlu0 0
      %358 = vperm.xlu0 %357, %v313
      %v359 = vpop.permute.xlu0 %358
      %360 = vset.pattern.permute.xlu0 0
      %361 = vperm.xlu0 %360, %v318
      %v362 = vpop.permute.xlu0 %361
      %363 = vset.pattern.permute.xlu0 0
      %364 = vperm.xlu0 %363, %v323
      %v365 = vpop.permute.xlu0 %364
      %366 = vset.pattern.permute.xlu0 0
      %367 = vperm.xlu0 %366, %v328
      %v368 = vpop.permute.xlu0 %367
      %369 = vset.pattern.permute.xlu0 0
      %370 = vperm.xlu0 %369, %v333
      %v371 = vpop.permute.xlu0 %370
      %372 = vset.pattern.permute.xlu0 0
      %373 = vperm.xlu0 %372, %v338
      %v374 = vpop.permute.xlu0 %373
      %v375 = vlaneseq
      %v376 = vand.u32 %v375, 127
      %v377 = vlaneseq
      %v378 = vshrl.u32 %v377, 7
      %v379 = vsub.s32 %v376, %v378
      %v380 = vrot.slane %v353, %v379
      %v381 = vlaneseq
      %v382 = vshrl.u32 %v381, 7
      %v383 = vsub.s32 %v376, %v382
      %v384 = vrot.slane %v356, %v383
      %v385 = vlaneseq
      %v386 = vshrl.u32 %v385, 7
      %v387 = vsub.s32 %v376, %v386
      %v388 = vrot.slane %v359, %v387
      %v389 = vlaneseq
      %v390 = vshrl.u32 %v389, 7
      %v391 = vsub.s32 %v376, %v390
      %v392 = vrot.slane %v362, %v391
      %v393 = vlaneseq
      %v394 = vshrl.u32 %v393, 7
      %v395 = vsub.s32 %v376, %v394
      %v396 = vrot.slane %v365, %v395
      %v397 = vlaneseq
      %v398 = vshrl.u32 %v397, 7
      %v399 = vsub.s32 %v376, %v398
      %v400 = vrot.slane %v368, %v399
      %v401 = vlaneseq
      %v402 = vshrl.u32 %v401, 7
      %v403 = vsub.s32 %v376, %v402
      %v404 = vrot.slane %v371, %v403
      %v405 = vlaneseq
      %v406 = vshrl.u32 %v405, 7
      %v407 = vsub.s32 %v376, %v406
      %v408 = vrot.slane %v374, %v407
      %vm409 = vcmask 1041409
      %v410 = vsel %vm409, %v384, %v380
      %vm411 = vcmask 1042434
      %v412 = vsel %vm411, %v388, %v410
      %vm413 = vcmask 1043459
      %v414 = vsel %vm413, %v392, %v412
      %vm415 = vcmask 1044484
      %v416 = vsel %vm415, %v396, %v414
      %vm417 = vcmask 1045509
      %v418 = vsel %vm417, %v400, %v416
      %vm419 = vcmask 1046534
      %v420 = vsel %vm419, %v404, %v418
      %vm421 = vcmask 1047559
      %v422 = vsel %vm421, %v408, %v420
      %v424 = vsel %vm342, %v422, -3.4028235e+38
      %vm425 = vcmask 64512
      %v426 = vsel %vm425, %v424, -inf
      %427 = vmax.xlane.f32.xlu0 %v426
      %v428 = vpop.xlane.xlu0 %427
      %v429 = vsub.f32 %v424, %v428
      %v430 = vmul.f32 %v429, 1.442695
      %v431 = vpow.pop %v430
      %v432 = vsel %vm425, %v431, 0.0
      %433 = vadd.xlane.f32.xlu0 %v432
      %v434 = vpop.xlane.xlu0 %433
      %v435 = vrcp.pop %v434
      %v436 = vmul.f32 %v431, %v435
      %v437 = vlaneseq
      %v438 = vshrl.u32 %v437, 7
      %v439 = vsub.s32 0, %v438
      %v440 = vrot.slane %v436, %v439
      %442 = vbcast.lane.b32.xlu0 %v440, 256
      %v443 = vpop.permute.xlu0 %442
      %v444 = vlaneseq
      %v445 = vshrl.u32 %v444, 7
      %v446 = vsub.s32 1, %v445
      %v447 = vrot.slane %v436, %v446
      %449 = vbcast.lane.b32.xlu0 %v447, 256
      %v450 = vpop.permute.xlu0 %449
      %v451 = vlaneseq
      %v452 = vshrl.u32 %v451, 7
      %v453 = vsub.s32 2, %v452
      %v454 = vrot.slane %v436, %v453
      %456 = vbcast.lane.b32.xlu0 %v454, 256
      %v457 = vpop.permute.xlu0 %456
      %v458 = vlaneseq
      %v459 = vshrl.u32 %v458, 7
      %v460 = vsub.s32 3, %v459
      %v461 = vrot.slane %v436, %v460
      %463 = vbcast.lane.b32.xlu0 %v461, 256
      %v464 = vpop.permute.xlu0 %463
      %v465 = vlaneseq
      %v466 = vshrl.u32 %v465, 7
      %v467 = vsub.s32 4, %v466
      %v468 = vrot.slane %v436, %v467
      %470 = vbcast.lane.b32.xlu0 %v468, 256
      %v471 = vpop.permute.xlu0 %470
      %v472 = vlaneseq
      %v473 = vshrl.u32 %v472, 7
      %v474 = vsub.s32 5, %v473
      %v475 = vrot.slane %v436, %v474
      %477 = vbcast.lane.b32.xlu0 %v475, 256
      %v478 = vpop.permute.xlu0 %477
      %v479 = vlaneseq
      %v480 = vshrl.u32 %v479, 7
      %v481 = vsub.s32 6, %v480
      %v482 = vrot.slane %v436, %v481
      %484 = vbcast.lane.b32.xlu0 %v482, 256
      %v485 = vpop.permute.xlu0 %484
      %v486 = vlaneseq
      %v487 = vshrl.u32 %v486, 7
      %v488 = vsub.s32 7, %v487
      %v489 = vrot.slane %v436, %v488
      %491 = vbcast.lane.b32.xlu0 %v489, 256
      %v492 = vpop.permute.xlu0 %491
      %v493 = vmul.f32 %v443, %v69
      %v494 = vmul.f32 %v450, %v70
      %v495 = vmul.f32 %v457, %v71
      %v496 = vmul.f32 %v464, %v72
      %v497 = vmul.f32 %v471, %v73
      %v498 = vmul.f32 %v478, %v74
      %v499 = vmul.f32 %v485, %v75
      %v500 = vmul.f32 %v492, %v76
      %v501 = vrot.slane %v493, 4
      %v502 = vadd.f32 %v493, %v501
      %v503 = vrot.slane %v502, 2
      %v504 = vadd.f32 %v502, %v503
      %v505 = vrot.slane %v504, 1
      %v506 = vadd.f32 %v504, %v505
      %v507 = vrot.slane %v494, 4
      %v508 = vadd.f32 %v494, %v507
      %v509 = vrot.slane %v508, 2
      %v510 = vadd.f32 %v508, %v509
      %v511 = vrot.slane %v510, 1
      %v512 = vadd.f32 %v510, %v511
      %v513 = vrot.slane %v495, 4
      %v514 = vadd.f32 %v495, %v513
      %v515 = vrot.slane %v514, 2
      %v516 = vadd.f32 %v514, %v515
      %v517 = vrot.slane %v516, 1
      %v518 = vadd.f32 %v516, %v517
      %v519 = vrot.slane %v496, 4
      %v520 = vadd.f32 %v496, %v519
      %v521 = vrot.slane %v520, 2
      %v522 = vadd.f32 %v520, %v521
      %v523 = vrot.slane %v522, 1
      %v524 = vadd.f32 %v522, %v523
      %v525 = vrot.slane %v497, 4
      %v526 = vadd.f32 %v497, %v525
      %v527 = vrot.slane %v526, 2
      %v528 = vadd.f32 %v526, %v527
      %v529 = vrot.slane %v528, 1
      %v530 = vadd.f32 %v528, %v529
      %v531 = vrot.slane %v498, 4
      %v532 = vadd.f32 %v498, %v531
      %v533 = vrot.slane %v532, 2
      %v534 = vadd.f32 %v532, %v533
      %v535 = vrot.slane %v534, 1
      %v536 = vadd.f32 %v534, %v535
      %v537 = vrot.slane %v499, 4
      %v538 = vadd.f32 %v499, %v537
      %v539 = vrot.slane %v538, 2
      %v540 = vadd.f32 %v538, %v539
      %v541 = vrot.slane %v540, 1
      %v542 = vadd.f32 %v540, %v541
      %v543 = vrot.slane %v500, 4
      %v544 = vadd.f32 %v500, %v543
      %v545 = vrot.slane %v544, 2
      %v546 = vadd.f32 %v544, %v545
      %v547 = vrot.slane %v546, 1
      %v548 = vadd.f32 %v546, %v547
      %v557 = vsel %vm409, %v512, %v506
      %v558 = vsel %vm411, %v518, %v557
      %v559 = vsel %vm413, %v524, %v558
      %v560 = vsel %vm415, %v530, %v559
      %v561 = vsel %vm417, %v536, %v560
      %v562 = vsel %vm419, %v542, %v561
      %v563 = vsel %vm421, %v548, %v562
      %565 = vst [vmem:[#allocation13] sm:$0xff] %v563
      %v566 = vpack.c.bf16 %v506, %v506
      %v567 = vpack.c.bf16 %v512, %v512
      %v568 = vpack.c.bf16 %v518, %v518
      %v569 = vpack.c.bf16 %v524, %v524
      %v570 = vpack.c.bf16 %v530, %v530
      %v571 = vpack.c.bf16 %v536, %v536
      %v572 = vpack.c.bf16 %v542, %v542
      %v573 = vpack.c.bf16 %v548, %v548
      %v582 = vunpack.c.l.b16 %v566
      %v583 = vunpack.c.l.b16 %v567
      %v584 = vunpack.c.l.b16 %v568
      %v585 = vunpack.c.l.b16 %v569
      %v586 = vunpack.c.l.b16 %v570
      %v587 = vunpack.c.l.b16 %v571
      %v588 = vunpack.c.l.b16 %v572
      %v589 = vunpack.c.l.b16 %v573
      %v590 = vpack.c.b16 %v582, %v582
      %v591 = vpack.c.b16 %v583, %v583
      %v592 = vpack.c.b16 %v584, %v584
      %v593 = vpack.c.b16 %v585, %v585
      %v594 = vpack.c.b16 %v586, %v586
      %v595 = vpack.c.b16 %v587, %v587
      %v596 = vpack.c.b16 %v588, %v588
      %v597 = vpack.c.b16 %v589, %v589
      %v598 = vunpack.c.l.b16 %v590
      %v599 = vunpack.c.l.b16 %v591
      %v600 = vunpack.c.l.b16 %v592
      %v601 = vunpack.c.l.b16 %v593
      %v602 = vunpack.c.l.b16 %v594
      %v603 = vunpack.c.l.b16 %v595
      %v604 = vunpack.c.l.b16 %v596
      %v605 = vunpack.c.l.b16 %v597
      %v606 = vsel %vm409, %v599, %v598
      %v607 = vsel %vm411, %v600, %v606
      %v608 = vsel %vm413, %v601, %v607
      %v609 = vsel %vm415, %v602, %v608
      %v610 = vsel %vm417, %v603, %v609
      %v611 = vsel %vm419, %v604, %v610
      %v612 = vsel %vm421, %v605, %v611
      %v613 = vpack.c.b16 %v612, %v612
      %615 = vst [vmem:[#allocation2] sm:$0xf] %v613
      %v616 = vld [vmem:[%s2] sm:$0xf]
      %v617 = vunpack.c.l.bf16 %v616
      %v619 = vrot.slane %v617, 1
      %v620 = vrot.slane %v617, 2
      %v621 = vrot.slane %v617, 3
      %v622 = vrot.slane %v617, 4
      %v623 = vrot.slane %v617, 5
      %v624 = vrot.slane %v617, 6
      %v625 = vrot.slane %v617, 7
      %v634 = vmul.f32 %v506, %v617
      %v635 = vmul.f32 %v512, %v619
      %v636 = vmul.f32 %v518, %v620
      %v637 = vmul.f32 %v524, %v621
      %v638 = vmul.f32 %v530, %v622
      %v639 = vmul.f32 %v536, %v623
      %v640 = vmul.f32 %v542, %v624
      %v641 = vmul.f32 %v548, %v625
      %v650 = vrot.slane %v635, 7
      %v651 = vsel %vm409, %v650, %v634
      %v652 = vrot.slane %v636, 6
      %v653 = vsel %vm411, %v652, %v651
      %v654 = vrot.slane %v637, 5
      %v655 = vsel %vm413, %v654, %v653
      %v656 = vrot.slane %v638, 4
      %v657 = vsel %vm415, %v656, %v655
      %v658 = vrot.slane %v639, 3
      %v659 = vsel %vm417, %v658, %v657
      %v660 = vrot.slane %v640, 2
      %v661 = vsel %vm419, %v660, %v659
      %v662 = vrot.slane %v641, 1
      %v663 = vsel %vm421, %v662, %v661
      %665 = vadd.xlane.f32.xlu0 %v663
      %v666 = vpop.xlane.xlu0 %665
      %vm667 = vcmask 7168
      %668 = vst.msk [vmem:[#allocation5] sm:$0xff] %vm667, %v666
      %669 = vst.msk [vmem:[#allocation3] sm:$0xff] %vm667, -inf
      %670 = vst.msk [vmem:[#allocation4] sm:$0xff] %vm667, 0.0
    $region45: #{tpu_custom_call.1} parent=1 // pred_fallthru
      _
    %v671 = vld [vmem:[%s3] sm:$0xf]
    %v672 = vld [vmem:[%s3 + $0x4] sm:$0xf]
    %v673 = vld [vmem:[%s3 + $0x8] sm:$0xf]
    %v674 = vld [vmem:[%s3 + $0xc] sm:$0xf]
    %v675 = vld [vmem:[%s3 + $0x10] sm:$0xf]
    %v676 = vld [vmem:[%s3 + $0x14] sm:$0xf]
    %v677 = vld [vmem:[%s3 + $0x18] sm:$0xf]
    %v678 = vld [vmem:[%s3 + $0x1c] sm:$0xf]
    %v679 = vld [vmem:[%s3 + $0x20] sm:$0xf]
    %v680 = vld [vmem:[%s3 + $0x24] sm:$0xf]
    %v681 = vld [vmem:[%s3 + $0x28] sm:$0xf]
    %v682 = vld [vmem:[%s3 + $0x2c] sm:$0xf]
    %v683 = vld [vmem:[%s3 + $0x30] sm:$0xf]
    %v684 = vld [vmem:[%s3 + $0x34] sm:$0xf]
    %v685 = vld [vmem:[%s3 + $0x38] sm:$0xf]
    %v686 = vld [vmem:[%s3 + $0x3c] sm:$0xf]
    %v687 = vld [vmem:[%s3 + $0x40] sm:$0xf]
    %v688 = vld [vmem:[%s3 + $0x44] sm:$0xf]
    %v689 = vld [vmem:[%s3 + $0x48] sm:$0xf]
    %v690 = vld [vmem:[%s3 + $0x4c] sm:$0xf]
    %v691 = vld [vmem:[%s3 + $0x50] sm:$0xf]
    %v692 = vld [vmem:[%s3 + $0x54] sm:$0xf]
    %v693 = vld [vmem:[%s3 + $0x58] sm:$0xf]
    %v694 = vld [vmem:[%s3 + $0x5c] sm:$0xf]
    %v695 = vld [vmem:[%s3 + $0x60] sm:$0xf]
    %v696 = vld [vmem:[%s3 + $0x64] sm:$0xf]
    %v697 = vld [vmem:[%s3 + $0x68] sm:$0xf]
    %v698 = vld [vmem:[%s3 + $0x6c] sm:$0xf]
    %v699 = vld [vmem:[%s3 + $0x70] sm:$0xf]
    %v700 = vld [vmem:[%s3 + $0x74] sm:$0xf]
    %v701 = vld [vmem:[%s3 + $0x78] sm:$0xf]
    %v702 = vld [vmem:[%s3 + $0x7c] sm:$0xf]
    %v703 = vld [vmem:[#allocation2] sm:$0xf]
    %v736 = vunpack.c.l.b16 %v671
    %v737 = vunpack.c.l.b16 %v672
    %v738 = vunpack.c.l.b16 %v673
    %v739 = vunpack.c.l.b16 %v674
    %v740 = vunpack.c.l.b16 %v675
    %v741 = vunpack.c.l.b16 %v676
    %v742 = vunpack.c.l.b16 %v677
    %v743 = vunpack.c.l.b16 %v678
    %v744 = vunpack.c.l.b16 %v679
    %v745 = vunpack.c.l.b16 %v680
    %v746 = vunpack.c.l.b16 %v681
    %v747 = vunpack.c.l.b16 %v682
    %v748 = vunpack.c.l.b16 %v683
    %v749 = vunpack.c.l.b16 %v684
    %v750 = vunpack.c.l.b16 %v685
    %v751 = vunpack.c.l.b16 %v686
    %v752 = vunpack.c.l.b16 %v687
    %v753 = vunpack.c.l.b16 %v688
    %v754 = vunpack.c.l.b16 %v689
    %v755 = vunpack.c.l.b16 %v690
    %v756 = vunpack.c.l.b16 %v691
    %v757 = vunpack.c.l.b16 %v692
    %v758 = vunpack.c.l.b16 %v693
    %v759 = vunpack.c.l.b16 %v694
    %v760 = vunpack.c.l.b16 %v695
    %v761 = vunpack.c.l.b16 %v696
    %v762 = vunpack.c.l.b16 %v697
    %v763 = vunpack.c.l.b16 %v698
    %v764 = vunpack.c.l.b16 %v699
    %v765 = vunpack.c.l.b16 %v700
    %v766 = vunpack.c.l.b16 %v701
    %v767 = vunpack.c.l.b16 %v702
    %v768 = vpack.c.b16 %v737, %v736
    %v769 = vpack.c.b16 %v739, %v738
    %v770 = vpack.c.b16 %v741, %v740
    %v771 = vpack.c.b16 %v743, %v742
    %v772 = vpack.c.b16 %v745, %v744
    %v773 = vpack.c.b16 %v747, %v746
    %v774 = vpack.c.b16 %v749, %v748
    %v775 = vpack.c.b16 %v751, %v750
    %v776 = vpack.c.b16 %v753, %v752
    %v777 = vpack.c.b16 %v755, %v754
    %v778 = vpack.c.b16 %v757, %v756
    %v779 = vpack.c.b16 %v759, %v758
    %v780 = vpack.c.b16 %v761, %v760
    %v781 = vpack.c.b16 %v763, %v762
    %v782 = vpack.c.b16 %v765, %v764
    %v783 = vpack.c.b16 %v767, %v766
    %800 = vmatprep.subr.bf16.mxu0 0
    %801 = vmatpush1.bf16.xpose.msra.mxu0 %v768
    %802 = vmatprep.subr.bf16.mxu0 0
    %803 = vmatpush1.bf16.xpose.msra.mxu0 %v769
    %804 = vmatprep.subr.bf16.mxu0 0
    %805 = vmatpush1.bf16.xpose.msra.mxu0 %v770
    %806 = vmatprep.subr.bf16.mxu0 0
    %807 = vmatpush1.bf16.xpose.msra.mxu0 %v771
    %808 = vmatprep.subr.bf16.mxu0 0
    %809 = vmatpush1.bf16.xpose.msra.mxu0 %v772
    %810 = vmatprep.subr.bf16.mxu0 0
    %811 = vmatpush1.bf16.xpose.msra.mxu0 %v773
    %812 = vmatprep.subr.bf16.mxu0 0
    %813 = vmatpush1.bf16.xpose.msra.mxu0 %v774
    %814 = vmatprep.subr.bf16.mxu0 0
    %815 = vmatpush1.bf16.xpose.msra.mxu0 %v775
    %816 = vmatprep.subr.bf16.mxu0 0
    %817 = vmatpush1.bf16.xpose.msra.mxu0 %v776
    %818 = vmatprep.subr.bf16.mxu0 0
    %819 = vmatpush1.bf16.xpose.msra.mxu0 %v777
    %820 = vmatprep.subr.bf16.mxu0 0
    %821 = vmatpush1.bf16.xpose.msra.mxu0 %v778
    %822 = vmatprep.subr.bf16.mxu0 0
    %823 = vmatpush1.bf16.xpose.msra.mxu0 %v779
    %824 = vmatprep.subr.bf16.mxu0 0
    %825 = vmatpush1.bf16.xpose.msra.mxu0 %v780
    %826 = vmatprep.subr.bf16.mxu0 0
    %827 = vmatpush1.bf16.xpose.msra.mxu0 %v781
    %828 = vmatprep.subr.bf16.mxu0 0
    %829 = vmatpush1.bf16.xpose.msra.mxu0 %v782
    %830 = vmatprep.subr.bf16.mxu0 0
    %831 = vmatpush1.bf16.xpose.msra.mxu0 %v783
    %832 = vmatprep.mubr.bf16.mxu0 0
    %833 = vmatmul.mubr.bf16.gmra.mrb[0].mxu0 %v703
    %v834 = vpop.f32.mrb[0].mxu0
    %v835 = vadd.f32 0.0, %v834
    %v836 = vpop.f32.mrb[0].mxu0
    %v837 = vadd.f32 0.0, %v836
    %v838 = vpop.f32.mrb[0].mxu0
    %v839 = vpop.f32.mrb[0].mxu0
    %840 = vdwg.mxu0
    %841 = vst [vmem:[#allocation12] sm:$0xff] %v835
    %842 = vst [vmem:[#allocation12 + $0x8] sm:$0xff] %v837
    %v843 = vld [vmem:[#allocation3] sm:$0xff]
    %v844 = vmax.f32 %v835, %v837
    %845 = vmax.xlane.f32.xlu0 %v844
    %v846 = vpop.xlane.xlu0 %845
    %v847 = vmax.f32 %v843, %v846
    %v848 = vld [vmem:[#allocation4] sm:$0xff]
    %v849 = vsub.f32 %v843, %v847
    %v850 = vmul.f32 %v849, 1.442695
    %v851 = vpow.pop %v850
    %v852 = vmul.f32 %v848, %v851
    %854 = vset.pattern.permute.xlu0 0
    %855 = vperm.xlu0 %854, %v847
    %v856 = vpop.permute.xlu0 %855
    %v858 = vsub.f32 %v835, %v856
    %v859 = vsub.f32 %v837, %v856
    %v860 = vmul.f32 %v858, 1.442695
    %v861 = vpow.pop %v860
    %v862 = vmul.f32 %v859, 1.442695
    %v863 = vpow.pop %v862
    %v864 = vadd.f32 %v861, %v863
    %865 = vadd.xlane.f32.xlu0 %v864
    %v866 = vpop.xlane.xlu0 %865
    %v867 = vadd.f32 %v852, %v866
    %vm868 = vcmask 7168
    %869 = vst.msk [vmem:[#allocation4] sm:$0xff] %vm868, %v867
    %870 = vst.msk [vmem:[#allocation3] sm:$0xff] %vm868, %v847
    // Predicated region
    $region46: #{tpu_custom_call.1} parent=1 // pred_check
      %p871 = pneg %p65
    $region47: #{tpu_custom_call.1} parent=1 // pred_check_branch
      %873 = sbr.rel (%p871) target = $region49
    $region48: #{tpu_custom_call.1} parent=1 // pred_region
      %v874 = vld [vmem:[#allocation3] sm:$0xff]
      %v875 = vld [vmem:[#allocation4] sm:$0xff]
      %v876 = vlog2.pop %v875
      %v877 = vmul.f32 %v876, 0.6931472
      %v878 = vadd.f32 %v874, %v877
      %v879 = vld [vmem:[#allocation5] sm:$0xff]
      %v880 = vsub.f32 %v878, %v879
      %881 = vst.msk [vmem:[%s10] sm:$0xff] %vm868, %v880
    $region49: #{tpu_custom_call.1} parent=1 // pred_fallthru
      _
    // Predicated region
    $region50: #{tpu_custom_call.1} parent=1 // pred_check
      _
    $region51: #{tpu_custom_call.1} parent=1 // pred_check_branch
      %883 = sbr.rel (0) target = $region53
    $region52: #{tpu_custom_call.1} parent=1 // pred_region
      %s885 = ssub.s32 256, 256
      %886 = vsyncadd [#allocation9], %s885
      %s888 = sshll.u32 [#allocation12], 4
      %s889 = int_to_ptr.vmem [resolvable:$true] %s888
      %891 = dma.vmem_to_hbm [thread:$0]  %s889, 256, %s8, [#allocation9]
    $region53: #{tpu_custom_call.1} parent=1 // pred_fallthru
      _
    // Predicated region
    $region54: #{tpu_custom_call.1} parent=1 // pred_check
      _
    $region55: #{tpu_custom_call.1} parent=1 // pred_check_branch
      %893 = sbr.rel (0) target = $region57
    $region56: #{tpu_custom_call.1} parent=1 // pred_region
      %s895 = ssub.s32 128, 128
      %896 = vsyncadd [#allocation14], %s895
      %s898 = sshll.u32 [#allocation13], 4
      %s899 = int_to_ptr.vmem [resolvable:$true] %s898
      %901 = dma.vmem_to_hbm [thread:$0]  %s899, 128, %s9, [#allocation14]
    $region57: #{tpu_custom_call.1} parent=1 // pred_fallthru
      _
    // Predicated region
    $region58: #{tpu_custom_call.1} parent=1 // pred_check
      _
    $region59: #{tpu_custom_call.1} parent=1 // pred_check_branch
      %903 = sbr.rel (0) target = $region61
    $region60: #{tpu_custom_call.1} parent=1 // pred_region
      _
    $region61: #{tpu_custom_call.1} parent=1 // pred_fallthru
      _
    // Predicated region
    $region62: #{tpu_custom_call.1} parent=1 // pred_check
      _
    $region63: #{tpu_custom_call.1} parent=1 // pred_check_branch
      %905 = sbr.rel (0) target = $region65
    $region64: #{tpu_custom_call.1} parent=1 // pred_region
      %906 = dma.done [#allocation9], 256
    $region65: #{tpu_custom_call.1} parent=1 // pred_fallthru
      _
    // Predicated region
    $region66: #{tpu_custom_call.1} parent=1 // pred_check
      _
    $region67: #{tpu_custom_call.1} parent=1 // pred_check_branch
      %908 = sbr.rel (0) target = $region69
    $region68: #{tpu_custom_call.1} parent=1 // pred_region
      %909 = dma.done [#allocation14], 128
    $region69: #{tpu_custom_call.1} parent=1 // pred_fallthru
      _
    // Predicated region
    $region70: #{tpu_custom_call.1} parent=1 // pred_check
      _
    $region71: #{tpu_custom_call.1} parent=1 // pred_check_branch
      %911 = sbr.rel (0) target = $region73
    $region72: #{tpu_custom_call.1} parent=1 // pred_region
      _
    $region73: #{tpu_custom_call.1} parent=1 // pred_fallthru
      _
    %912 = vsyncpa [#allocation8], 1
    %913 = vsyncpa [#allocation11], 1
    %914 = vsyncpa [#allocation9], 1
    %915 = vsyncpa [#allocation14], 1

</llo_original>
